<compile_context>
chip_gen: v6e
topology: v6e:2x2x1
jax: 0.10.0
libtpu: 0.0.40
codegen_flags: <defaults>
</compile_context>

<pallas_src>
import math
import functools

import jax
import jax.numpy as jnp
from jax import lax
from jax.experimental import pallas as pl
from jax.experimental.pallas import tpu as pltpu


# ---------------------------------------------------------------------------
# Kernel 1: fused q/k/v linear projections, written head-split in bf16.
# ---------------------------------------------------------------------------
def _qkv_proj_kernel(q_ref, k_ref, v_ref,
                     wq_ref, bq_ref, wk_ref, bk_ref, wv_ref, bv_ref,
                     qo_ref, ko_ref, vo_ref,
                     *, num_heads, head_dim):
    def project(x_ref, w_ref, b_ref, o_ref):
        # (T, E) @ (E, E) on the MXU, f32 accumulation.
        y = jnp.dot(x_ref[0], w_ref[...],
                    preferred_element_type=jnp.float32) + b_ref[...]
        # Head split via static lane slices; stored bf16 for the attention MXU.
        for h in range(num_heads):
            lo = h * head_dim
            o_ref[0, h] = y[:, lo:lo + head_dim].astype(o_ref.dtype)

    project(q_ref, wq_ref, bq_ref, qo_ref)
    project(k_ref, wk_ref, bk_ref, ko_ref)
    project(v_ref, wv_ref, bv_ref, vo_ref)


# ---------------------------------------------------------------------------
# Kernel 2: banded (sliding-window) flash attention with fused out-projection.
# grid = (B, n_q_tiles, num_heads, n_kv_tiles_in_band)
# ---------------------------------------------------------------------------
def _banded_attn_kernel(q_ref, k_ref, v_ref, wo_ref, bo_ref, o_ref,
                        m_sc, l_sc, acc_sc, oacc_sc,
                        *, window_size, kv_offset, nk_blocks, seq_len):
    T = q_ref.shape[2]
    qi = pl.program_id(1)
    h = pl.program_id(2)
    r = pl.program_id(3)
    n_h = pl.num_programs(2)
    n_r = pl.num_programs(3)

    neg = jnp.float32(-1e30)   # finite "-inf": keeps the online softmax NaN-free

    @pl.when(jnp.logical_and(h == 0, r == 0))
    def _():
        oacc_sc[...] = jnp.zeros_like(oacc_sc)

    @pl.when(r == 0)
    def _():
        m_sc[...] = jnp.full_like(m_sc, neg)
        l_sc[...] = jnp.zeros_like(l_sc)
        acc_sc[...] = jnp.zeros_like(acc_sc)

    # Which kv tile this step covers (same clamped formula as the index_map).
    kv_rel = qi + r - kv_offset
    kv_idx = jnp.minimum(jnp.maximum(kv_rel, 0), nk_blocks - 1)
    block_valid = jnp.logical_and(kv_rel >= 0, kv_rel < nk_blocks)

    @pl.when(block_valid)
    def _():
        qt = q_ref[0, 0]          # (T, Dh) bf16, already scaled by 1/sqrt(Dh)
        kt = k_ref[0, 0]          # (T, Dh) bf16
        vt = v_ref[0, 0]          # (T, Dh) bf16

        # Q @ K^T with bf16 operands, f32 accumulation (contraction over Dh).
        s = lax.dot_general(qt, kt, (((1,), (1,)), ((), ())),
                            preferred_element_type=jnp.float32)   # (T, T)

        # Tile-local band mask (|i - j| <= window) + padded-key mask.
        q_pos = qi * T + lax.broadcasted_iota(jnp.int32, s.shape, 0)
        k_pos = kv_idx * T + lax.broadcasted_iota(jnp.int32, s.shape, 1)
        keep = jnp.abs(q_pos - k_pos) <= window_size
        keep = jnp.logical_and(keep, k_pos < seq_len)
        s = jnp.where(keep, s, neg)

        # Online softmax update.
        m_prev = m_sc[...]
        m_new = jnp.maximum(m_prev, jnp.max(s, axis=-1, keepdims=True))
        alpha = jnp.exp(m_prev - m_new)
        p = jnp.exp(s - m_new)
        l_sc[...] = alpha * l_sc[...] + jnp.sum(p, axis=-1, keepdims=True)
        acc_sc[...] = alpha * acc_sc[...] + jnp.dot(
            p.astype(vt.dtype), vt, preferred_element_type=jnp.float32)
        m_sc[...] = m_new

    # Last kv tile of this head: fold the head output straight into the
    # output-projection accumulator (no concat, no narrow-lane output writes).
    @pl.when(r == n_r - 1)
    def _():
        head_out = acc_sc[...] * pl.reciprocal(l_sc[...], approx=True)
        oacc_sc[...] = oacc_sc[...] + jnp.dot(
            head_out, wo_ref[0], preferred_element_type=jnp.float32)

    # Last head, last kv tile: single lane-dense (T, E) store of the output.
    @pl.when(jnp.logical_and(r == n_r - 1, h == n_h - 1))
    def _():
        o_ref[0] = (oacc_sc[...] + bo_ref[...]).astype(o_ref.dtype)


# ---------------------------------------------------------------------------
# Host wrapper
# ---------------------------------------------------------------------------
def sliding_window_attention(q, k, v, params, *, num_heads, window_size):
    """q, k, v: [B, S, E] f32.  Weights are (E_in, E_out); biases are (1, E)."""
    B, S, E = q.shape
    head_dim = E // num_heads
    scale = 1.0 / math.sqrt(head_dim)

    # Query/key tile: 128 for long sequences, else S rounded up to multiple of 8.
    T = 128 if S >= 128 else ((S + 7) // 8) * 8
    S_pad = pl.cdiv(S, T) * T
    nk = S_pad // T                                  # number of q / kv tiles
    R = min(pl.cdiv(window_size, T), nk - 1)         # banded kv-tile reach/side
    n_r = 2 * R + 1                                  # kv tiles visited per q-tile

    if S_pad != S:
        pad = ((0, 0), (0, S_pad - S), (0, 0))
        qp = jnp.pad(q, pad)
        kp = jnp.pad(k, pad)
        vp = jnp.pad(v, pad)
    else:
        qp, kp, vp = q, k, v

    # Fold the 1/sqrt(head_dim) scale into the Q projection (host-side, free).
    wq = params["wq"] * scale
    bq = params["bq"] * scale

    # ----- kernel 1: projections -----
    seq_spec = pl.BlockSpec((1, T, E), lambda b, s: (b, s, 0))
    w_spec = pl.BlockSpec((E, E), lambda b, s: (0, 0))
    bias_spec = pl.BlockSpec((1, E), lambda b, s: (0, 0))
    head_out_spec = pl.BlockSpec((1, num_heads, T, head_dim),
                                 lambda b, s: (b, 0, s, 0))
    head_shape = jax.ShapeDtypeStruct((B, num_heads, S_pad, head_dim),
                                      jnp.bfloat16)

    Qh, Kh, Vh = pl.pallas_call(
        functools.partial(_qkv_proj_kernel,
                          num_heads=num_heads, head_dim=head_dim),
        out_shape=(head_shape, head_shape, head_shape),
        grid=(B, nk),
        in_specs=[seq_spec, seq_spec, seq_spec,
                  w_spec, bias_spec,     # q_proj
                  w_spec, bias_spec,     # k_proj
                  w_spec, bias_spec],    # v_proj
        out_specs=(head_out_spec, head_out_spec, head_out_spec),
        compiler_params=pltpu.CompilerParams(
            dimension_semantics=("parallel", "parallel")),
    )(qp, kp, vp, wq, bq,
      params["wk"], params["bk"], params["wv"], params["bv"])

    # Output projection weight, head-split: wo_heads[h, d, :] == wo[h*Dh + d, :].
    wo_heads = params["wo"].reshape(num_heads, head_dim, E)

    def qkv_spec(index_map):
        return pl.BlockSpec((1, 1, T, head_dim), index_map)

    def kv_index(b, qi, h, r):
        idx = qi + r - R
        idx = jnp.minimum(jnp.maximum(idx, 0), nk - 1)
        return (b, h, idx, 0)

    # ----- kernel 2: banded flash attention + fused output projection -----
    out = pl.pallas_call(
        functools.partial(_banded_attn_kernel,
                          window_size=window_size, kv_offset=R,
                          nk_blocks=nk, seq_len=S),
        out_shape=jax.ShapeDtypeStruct((B, S_pad, E), q.dtype),
        grid=(B, nk, num_heads, n_r),
        in_specs=[
            qkv_spec(lambda b, qi, h, r: (b, h, qi, 0)),               # Q
            qkv_spec(kv_index),                                        # K
            qkv_spec(kv_index),                                        # V
            pl.BlockSpec((1, head_dim, E), lambda b, qi, h, r: (h, 0, 0)),  # Wo
            pl.BlockSpec((1, E), lambda b, qi, h, r: (0, 0)),               # bo
        ],
        out_specs=pl.BlockSpec((1, T, E), lambda b, qi, h, r: (b, qi, 0)),
        scratch_shapes=[
            pltpu.VMEM((T, 1), jnp.float32),          # running max
            pltpu.VMEM((T, 1), jnp.float32),          # running denom
            pltpu.VMEM((T, head_dim), jnp.float32),   # per-head PV accumulator
            pltpu.VMEM((T, E), jnp.float32),          # fused out-proj accumulator
        ],
        compiler_params=pltpu.CompilerParams(
            dimension_semantics=("parallel", "parallel",
                                 "arbitrary", "arbitrary")),
    )(Qh, Kh, Vh, wo_heads, params["bo"])

    return out[:, :S, :] if S_pad != S else out


# ---------------------------------------------------------------------------
# Plain-JAX reference (mirror of the PyTorch forward) for verification.
# ---------------------------------------------------------------------------
def _reference(q, k, v, params, *, num_heads, window_size):
    B, S, E = q.shape
    Dh = E // num_heads

    def proj(x, w, b):
        return x @ w + b  # w already (in, out)

    def to_heads(x):
        return x.reshape(B, S, num_heads, Dh).transpose(0, 2, 1, 3)

    Q = to_heads(proj(q, params["wq"], params["bq"]))
    K = to_heads(proj(k, params["wk"], params["bk"]))
    V = to_heads(proj(v, params["wv"], params["bv"]))

    scores = jnp.einsum("bhqd,bhkd->bhqk", Q, K) / math.sqrt(Dh)
    idx = jnp.arange(S)
    keep = jnp.abs(idx[:, None] - idx[None, :]) <= window_size
    scores = jnp.where(keep[None, None], scores, -jnp.inf)
    probs = jax.nn.softmax(scores, axis=-1)
    out = jnp.einsum("bhqk,bhkd->bhqd", probs, V)
    out = out.transpose(0, 2, 1, 3).reshape(B, S, E)
    return proj(out, params["wo"], params["bo"])


def _make_params(key, E):
    keys = jax.random.split(key, 8)

    def w_init(k):
        return 0.02 * jax.random.normal(k, (E, E), dtype=jnp.float32)

    def b_init(k):
        return 0.01 * jax.random.normal(k, (1, E), dtype=jnp.float32)

    return {
        "wq": w_init(keys[0]), "bq": b_init(keys[1]),
        "wk": w_init(keys[2]), "bk": b_init(keys[3]),
        "wv": w_init(keys[4]), "bv": b_init(keys[5]),
        "wo": w_init(keys[6]), "bo": b_init(keys[7]),
    }


def _run_case(key, B, S, E, num_heads, window_size):
    kp, kq, kk, kv = jax.random.split(key, 4)
    params = _make_params(kp, E)
    q = jax.random.normal(kq, (B, S, E), dtype=jnp.float32)
    k = jax.random.normal(kk, (B, S, E), dtype=jnp.float32)
    v = jax.random.normal(kv, (B, S, E), dtype=jnp.float32)

    out = sliding_window_attention(q, k, v, params,
                                   num_heads=num_heads,
                                   window_size=window_size)
    out = jax.block_until_ready(out)

    ref = _reference(q, k, v, params,
                     num_heads=num_heads, window_size=window_size)
    assert out.shape == (B, S, E)
    # bf16 attention operands + approx reciprocal -> looser tolerance than f32.
    assert jnp.allclose(out, ref, atol=2e-2, rtol=2e-2), "mismatch vs reference"


if __name__ == "__main__":
    key = jax.random.PRNGKey(0)
    key_small, key_band = jax.random.split(key)

    # Config matching the module's small test setting (single q/kv tile).
    _run_case(key_small, B=2, S=8, E=32, num_heads=4, window_size=2)

    # Slightly larger config that exercises the banded multi-tile path
    # (2 query tiles, clamped/skipped out-of-band kv tiles).
    _run_case(key_band, B=1, S=256, E=128, num_heads=4, window_size=16)

    print("KERNEL_OK")
</pallas_src>

<mosaic_0001>
module attributes {stable_mosaic.version = 11 : i64} {
  func.func @_qkv_proj_kernel(%arg0: i32, %arg1: i32, %arg2: memref<1x8x32xf32, #tpu.memory_space<vmem>>, %arg3: memref<1x8x32xf32, #tpu.memory_space<vmem>>, %arg4: memref<1x8x32xf32, #tpu.memory_space<vmem>>, %arg5: memref<32x32xf32, #tpu.memory_space<vmem>>, %arg6: memref<1x32xf32, #tpu.memory_space<vmem>>, %arg7: memref<32x32xf32, #tpu.memory_space<vmem>>, %arg8: memref<1x32xf32, #tpu.memory_space<vmem>>, %arg9: memref<32x32xf32, #tpu.memory_space<vmem>>, %arg10: memref<1x32xf32, #tpu.memory_space<vmem>>, %arg11: memref<1x4x8x8xbf16, #tpu.memory_space<vmem>>, %arg12: memref<1x4x8x8xbf16, #tpu.memory_space<vmem>>, %arg13: memref<1x4x8x8xbf16, #tpu.memory_space<vmem>>) attributes {dimension_semantics = [#tpu.dimension_semantics<parallel>, #tpu.dimension_semantics<parallel>], iteration_bounds = array<i64: 2, 1>, scalar_prefetch = 0 : i64, scratch_operands = 0 : i64, tpu.core_type = #tpu.core_type<tc>, window_params = [{transform_indices = @transform_0, window_bounds = array<i64: 1, 8, 32>}, {transform_indices = @transform_1, window_bounds = array<i64: 1, 8, 32>}, {transform_indices = @transform_2, window_bounds = array<i64: 1, 8, 32>}, {pipeline_mode = #tpu.pipeline_mode<synchronous>, transform_indices = @transform_3, window_bounds = array<i64: 32, 32>}, {pipeline_mode = #tpu.pipeline_mode<synchronous>, transform_indices = @transform_4, window_bounds = array<i64: 1, 32>}, {pipeline_mode = #tpu.pipeline_mode<synchronous>, transform_indices = @transform_5, window_bounds = array<i64: 32, 32>}, {pipeline_mode = #tpu.pipeline_mode<synchronous>, transform_indices = @transform_6, window_bounds = array<i64: 1, 32>}, {pipeline_mode = #tpu.pipeline_mode<synchronous>, transform_indices = @transform_7, window_bounds = array<i64: 32, 32>}, {pipeline_mode = #tpu.pipeline_mode<synchronous>, transform_indices = @transform_8, window_bounds = array<i64: 1, 32>}, {transform_indices = @transform_9, window_bounds = array<i64: 1, 4, 8, 8>}, {transform_indices = @transform_10, window_bounds = array<i64: 1, 4, 8, 8>}, {transform_indices = @transform_11, window_bounds = array<i64: 1, 4, 8, 8>}]} {
    %c0 = arith.constant 0 : index
    %c0_0 = arith.constant 0 : index
    %c0_1 = arith.constant 0 : index
    %0 = vector.load %arg2[%c0, %c0_0, %c0_1] : memref<1x8x32xf32, #tpu.memory_space<vmem>>, vector<1x8x32xf32>
    %1 = vector.shape_cast %0 : vector<1x8x32xf32> to vector<8x32xf32>
    %c0_2 = arith.constant 0 : index
    %c0_3 = arith.constant 0 : index
    %2 = vector.load %arg5[%c0_2, %c0_3] : memref<32x32xf32, #tpu.memory_space<vmem>>, vector<32x32xf32>
    %cst = arith.constant dense<0.000000e+00> : vector<8x32xf32>
    %3 = tpu.matmul %1, %2, %cst {dimension_numbers = #tpu.dot_dimension_numbers<[1], [0], [0], [1], [0, 0, 1, 1], [], []>} : vector<8x32xf32>, vector<32x32xf32>, vector<8x32xf32> -> vector<8x32xf32>
    %c0_4 = arith.constant 0 : index
    %c0_5 = arith.constant 0 : index
    %4 = vector.load %arg6[%c0_4, %c0_5] : memref<1x32xf32, #tpu.memory_space<vmem>>, vector<1x32xf32>
    %5 = vector.broadcast %4 : vector<1x32xf32> to vector<8x32xf32>
    %6 = arith.addf %3, %5 : vector<8x32xf32>
    %7 = vector.extract_strided_slice %6 {offsets = [0, 0], sizes = [8, 8], strides = [1, 1]} : vector<8x32xf32> to vector<8x8xf32>
    %8 = arith.truncf %7 : vector<8x8xf32> to vector<8x8xbf16>
    %c0_6 = arith.constant 0 : index
    %c0_7 = arith.constant 0 : index
    %c0_8 = arith.constant 0 : index
    %c0_9 = arith.constant 0 : index
    %9 = vector.load %arg11[%c0_6, %c0_7, %c0_8, %c0_9] : memref<1x4x8x8xbf16, #tpu.memory_space<vmem>>, vector<1x1x8x8xbf16>
    %10 = vector.shape_cast %9 : vector<1x1x8x8xbf16> to vector<8x8xbf16>
    %11 = vector.shape_cast %8 : vector<8x8xbf16> to vector<1x1x8x8xbf16>
    tpu.vector_store %arg11[%c0_6, %c0_7, %c0_8, %c0_9], %11 {strides = array<i32>} : memref<1x4x8x8xbf16, #tpu.memory_space<vmem>>, vector<1x1x8x8xbf16>,
    %12 = vector.extract_strided_slice %6 {offsets = [0, 8], sizes = [8, 8], strides = [1, 1]} : vector<8x32xf32> to vector<8x8xf32>
    %13 = arith.truncf %12 : vector<8x8xf32> to vector<8x8xbf16>
    %c0_10 = arith.constant 0 : index
    %c1 = arith.constant 1 : index
    %c0_11 = arith.constant 0 : index
    %c0_12 = arith.constant 0 : index
    %14 = vector.load %arg11[%c0_10, %c1, %c0_11, %c0_12] : memref<1x4x8x8xbf16, #tpu.memory_space<vmem>>, vector<1x1x8x8xbf16>
    %15 = vector.shape_cast %14 : vector<1x1x8x8xbf16> to vector<8x8xbf16>
    %16 = vector.shape_cast %13 : vector<8x8xbf16> to vector<1x1x8x8xbf16>
    tpu.vector_store %arg11[%c0_10, %c1, %c0_11, %c0_12], %16 {strides = array<i32>} : memref<1x4x8x8xbf16, #tpu.memory_space<vmem>>, vector<1x1x8x8xbf16>,
    %17 = vector.extract_strided_slice %6 {offsets = [0, 16], sizes = [8, 8], strides = [1, 1]} : vector<8x32xf32> to vector<8x8xf32>
    %18 = arith.truncf %17 : vector<8x8xf32> to vector<8x8xbf16>
    %c0_13 = arith.constant 0 : index
    %c2 = arith.constant 2 : index
    %c0_14 = arith.constant 0 : index
    %c0_15 = arith.constant 0 : index
    %19 = vector.load %arg11[%c0_13, %c2, %c0_14, %c0_15] : memref<1x4x8x8xbf16, #tpu.memory_space<vmem>>, vector<1x1x8x8xbf16>
    %20 = vector.shape_cast %19 : vector<1x1x8x8xbf16> to vector<8x8xbf16>
    %21 = vector.shape_cast %18 : vector<8x8xbf16> to vector<1x1x8x8xbf16>
    tpu.vector_store %arg11[%c0_13, %c2, %c0_14, %c0_15], %21 {strides = array<i32>} : memref<1x4x8x8xbf16, #tpu.memory_space<vmem>>, vector<1x1x8x8xbf16>,
    %22 = vector.extract_strided_slice %6 {offsets = [0, 24], sizes = [8, 8], strides = [1, 1]} : vector<8x32xf32> to vector<8x8xf32>
    %23 = arith.truncf %22 : vector<8x8xf32> to vector<8x8xbf16>
    %c0_16 = arith.constant 0 : index
    %c3 = arith.constant 3 : index
    %c0_17 = arith.constant 0 : index
    %c0_18 = arith.constant 0 : index
    %24 = vector.load %arg11[%c0_16, %c3, %c0_17, %c0_18] : memref<1x4x8x8xbf16, #tpu.memory_space<vmem>>, vector<1x1x8x8xbf16>
    %25 = vector.shape_cast %24 : vector<1x1x8x8xbf16> to vector<8x8xbf16>
    %26 = vector.shape_cast %23 : vector<8x8xbf16> to vector<1x1x8x8xbf16>
    tpu.vector_store %arg11[%c0_16, %c3, %c0_17, %c0_18], %26 {strides = array<i32>} : memref<1x4x8x8xbf16, #tpu.memory_space<vmem>>, vector<1x1x8x8xbf16>,
    %c0_19 = arith.constant 0 : index
    %c0_20 = arith.constant 0 : index
    %c0_21 = arith.constant 0 : index
    %27 = vector.load %arg3[%c0_19, %c0_20, %c0_21] : memref<1x8x32xf32, #tpu.memory_space<vmem>>, vector<1x8x32xf32>
    %28 = vector.shape_cast %27 : vector<1x8x32xf32> to vector<8x32xf32>
    %c0_22 = arith.constant 0 : index
    %c0_23 = arith.constant 0 : index
    %29 = vector.load %arg7[%c0_22, %c0_23] : memref<32x32xf32, #tpu.memory_space<vmem>>, vector<32x32xf32>
    %cst_24 = arith.constant dense<0.000000e+00> : vector<8x32xf32>
    %30 = tpu.matmul %28, %29, %cst_24 {dimension_numbers = #tpu.dot_dimension_numbers<[1], [0], [0], [1], [0, 0, 1, 1], [], []>} : vector<8x32xf32>, vector<32x32xf32>, vector<8x32xf32> -> vector<8x32xf32>
    %c0_25 = arith.constant 0 : index
    %c0_26 = arith.constant 0 : index
    %31 = vector.load %arg8[%c0_25, %c0_26] : memref<1x32xf32, #tpu.memory_space<vmem>>, vector<1x32xf32>
    %32 = vector.broadcast %31 : vector<1x32xf32> to vector<8x32xf32>
    %33 = arith.addf %30, %32 : vector<8x32xf32>
    %34 = vector.extract_strided_slice %33 {offsets = [0, 0], sizes = [8, 8], strides = [1, 1]} : vector<8x32xf32> to vector<8x8xf32>
    %35 = arith.truncf %34 : vector<8x8xf32> to vector<8x8xbf16>
    %c0_27 = arith.constant 0 : index
    %c0_28 = arith.constant 0 : index
    %c0_29 = arith.constant 0 : index
    %c0_30 = arith.constant 0 : index
    %36 = vector.load %arg12[%c0_27, %c0_28, %c0_29, %c0_30] : memref<1x4x8x8xbf16, #tpu.memory_space<vmem>>, vector<1x1x8x8xbf16>
    %37 = vector.shape_cast %36 : vector<1x1x8x8xbf16> to vector<8x8xbf16>
    %38 = vector.shape_cast %35 : vector<8x8xbf16> to vector<1x1x8x8xbf16>
    tpu.vector_store %arg12[%c0_27, %c0_28, %c0_29, %c0_30], %38 {strides = array<i32>} : memref<1x4x8x8xbf16, #tpu.memory_space<vmem>>, vector<1x1x8x8xbf16>,
    %39 = vector.extract_strided_slice %33 {offsets = [0, 8], sizes = [8, 8], strides = [1, 1]} : vector<8x32xf32> to vector<8x8xf32>
    %40 = arith.truncf %39 : vector<8x8xf32> to vector<8x8xbf16>
    %c0_31 = arith.constant 0 : index
    %c1_32 = arith.constant 1 : index
    %c0_33 = arith.constant 0 : index
    %c0_34 = arith.constant 0 : index
    %41 = vector.load %arg12[%c0_31, %c1_32, %c0_33, %c0_34] : memref<1x4x8x8xbf16, #tpu.memory_space<vmem>>, vector<1x1x8x8xbf16>
    %42 = vector.shape_cast %41 : vector<1x1x8x8xbf16> to vector<8x8xbf16>
    %43 = vector.shape_cast %40 : vector<8x8xbf16> to vector<1x1x8x8xbf16>
    tpu.vector_store %arg12[%c0_31, %c1_32, %c0_33, %c0_34], %43 {strides = array<i32>} : memref<1x4x8x8xbf16, #tpu.memory_space<vmem>>, vector<1x1x8x8xbf16>,
    %44 = vector.extract_strided_slice %33 {offsets = [0, 16], sizes = [8, 8], strides = [1, 1]} : vector<8x32xf32> to vector<8x8xf32>
    %45 = arith.truncf %44 : vector<8x8xf32> to vector<8x8xbf16>
    %c0_35 = arith.constant 0 : index
    %c2_36 = arith.constant 2 : index
    %c0_37 = arith.constant 0 : index
    %c0_38 = arith.constant 0 : index
    %46 = vector.load %arg12[%c0_35, %c2_36, %c0_37, %c0_38] : memref<1x4x8x8xbf16, #tpu.memory_space<vmem>>, vector<1x1x8x8xbf16>
    %47 = vector.shape_cast %46 : vector<1x1x8x8xbf16> to vector<8x8xbf16>
    %48 = vector.shape_cast %45 : vector<8x8xbf16> to vector<1x1x8x8xbf16>
    tpu.vector_store %arg12[%c0_35, %c2_36, %c0_37, %c0_38], %48 {strides = array<i32>} : memref<1x4x8x8xbf16, #tpu.memory_space<vmem>>, vector<1x1x8x8xbf16>,
    %49 = vector.extract_strided_slice %33 {offsets = [0, 24], sizes = [8, 8], strides = [1, 1]} : vector<8x32xf32> to vector<8x8xf32>
    %50 = arith.truncf %49 : vector<8x8xf32> to vector<8x8xbf16>
    %c0_39 = arith.constant 0 : index
    %c3_40 = arith.constant 3 : index
    %c0_41 = arith.constant 0 : index
    %c0_42 = arith.constant 0 : index
    %51 = vector.load %arg12[%c0_39, %c3_40, %c0_41, %c0_42] : memref<1x4x8x8xbf16, #tpu.memory_space<vmem>>, vector<1x1x8x8xbf16>
    %52 = vector.shape_cast %51 : vector<1x1x8x8xbf16> to vector<8x8xbf16>
    %53 = vector.shape_cast %50 : vector<8x8xbf16> to vector<1x1x8x8xbf16>
    tpu.vector_store %arg12[%c0_39, %c3_40, %c0_41, %c0_42], %53 {strides = array<i32>} : memref<1x4x8x8xbf16, #tpu.memory_space<vmem>>, vector<1x1x8x8xbf16>,
    %c0_43 = arith.constant 0 : index
    %c0_44 = arith.constant 0 : index
    %c0_45 = arith.constant 0 : index
    %54 = vector.load %arg4[%c0_43, %c0_44, %c0_45] : memref<1x8x32xf32, #tpu.memory_space<vmem>>, vector<1x8x32xf32>
    %55 = vector.shape_cast %54 : vector<1x8x32xf32> to vector<8x32xf32>
    %c0_46 = arith.constant 0 : index
    %c0_47 = arith.constant 0 : index
    %56 = vector.load %arg9[%c0_46, %c0_47] : memref<32x32xf32, #tpu.memory_space<vmem>>, vector<32x32xf32>
    %cst_48 = arith.constant dense<0.000000e+00> : vector<8x32xf32>
    %57 = tpu.matmul %55, %56, %cst_48 {dimension_numbers = #tpu.dot_dimension_numbers<[1], [0], [0], [1], [0, 0, 1, 1], [], []>} : vector<8x32xf32>, vector<32x32xf32>, vector<8x32xf32> -> vector<8x32xf32>
    %c0_49 = arith.constant 0 : index
    %c0_50 = arith.constant 0 : index
    %58 = vector.load %arg10[%c0_49, %c0_50] : memref<1x32xf32, #tpu.memory_space<vmem>>, vector<1x32xf32>
    %59 = vector.broadcast %58 : vector<1x32xf32> to vector<8x32xf32>
    %60 = arith.addf %57, %59 : vector<8x32xf32>
    %61 = vector.extract_strided_slice %60 {offsets = [0, 0], sizes = [8, 8], strides = [1, 1]} : vector<8x32xf32> to vector<8x8xf32>
    %62 = arith.truncf %61 : vector<8x8xf32> to vector<8x8xbf16>
    %c0_51 = arith.constant 0 : index
    %c0_52 = arith.constant 0 : index
    %c0_53 = arith.constant 0 : index
    %c0_54 = arith.constant 0 : index
    %63 = vector.load %arg13[%c0_51, %c0_52, %c0_53, %c0_54] : memref<1x4x8x8xbf16, #tpu.memory_space<vmem>>, vector<1x1x8x8xbf16>
    %64 = vector.shape_cast %63 : vector<1x1x8x8xbf16> to vector<8x8xbf16>
    %65 = vector.shape_cast %62 : vector<8x8xbf16> to vector<1x1x8x8xbf16>
    tpu.vector_store %arg13[%c0_51, %c0_52, %c0_53, %c0_54], %65 {strides = array<i32>} : memref<1x4x8x8xbf16, #tpu.memory_space<vmem>>, vector<1x1x8x8xbf16>,
    %66 = vector.extract_strided_slice %60 {offsets = [0, 8], sizes = [8, 8], strides = [1, 1]} : vector<8x32xf32> to vector<8x8xf32>
    %67 = arith.truncf %66 : vector<8x8xf32> to vector<8x8xbf16>
    %c0_55 = arith.constant 0 : index
    %c1_56 = arith.constant 1 : index
    %c0_57 = arith.constant 0 : index
    %c0_58 = arith.constant 0 : index
    %68 = vector.load %arg13[%c0_55, %c1_56, %c0_57, %c0_58] : memref<1x4x8x8xbf16, #tpu.memory_space<vmem>>, vector<1x1x8x8xbf16>
    %69 = vector.shape_cast %68 : vector<1x1x8x8xbf16> to vector<8x8xbf16>
    %70 = vector.shape_cast %67 : vector<8x8xbf16> to vector<1x1x8x8xbf16>
    tpu.vector_store %arg13[%c0_55, %c1_56, %c0_57, %c0_58], %70 {strides = array<i32>} : memref<1x4x8x8xbf16, #tpu.memory_space<vmem>>, vector<1x1x8x8xbf16>,
    %71 = vector.extract_strided_slice %60 {offsets = [0, 16], sizes = [8, 8], strides = [1, 1]} : vector<8x32xf32> to vector<8x8xf32>
    %72 = arith.truncf %71 : vector<8x8xf32> to vector<8x8xbf16>
    %c0_59 = arith.constant 0 : index
    %c2_60 = arith.constant 2 : index
    %c0_61 = arith.constant 0 : index
    %c0_62 = arith.constant 0 : index
    %73 = vector.load %arg13[%c0_59, %c2_60, %c0_61, %c0_62] : memref<1x4x8x8xbf16, #tpu.memory_space<vmem>>, vector<1x1x8x8xbf16>
    %74 = vector.shape_cast %73 : vector<1x1x8x8xbf16> to vector<8x8xbf16>
    %75 = vector.shape_cast %72 : vector<8x8xbf16> to vector<1x1x8x8xbf16>
    tpu.vector_store %arg13[%c0_59, %c2_60, %c0_61, %c0_62], %75 {strides = array<i32>} : memref<1x4x8x8xbf16, #tpu.memory_space<vmem>>, vector<1x1x8x8xbf16>,
    %76 = vector.extract_strided_slice %60 {offsets = [0, 24], sizes = [8, 8], strides = [1, 1]} : vector<8x32xf32> to vector<8x8xf32>
    %77 = arith.truncf %76 : vector<8x8xf32> to vector<8x8xbf16>
    %c0_63 = arith.constant 0 : index
    %c3_64 = arith.constant 3 : index
    %c0_65 = arith.constant 0 : index
    %c0_66 = arith.constant 0 : index
    %78 = vector.load %arg13[%c0_63, %c3_64, %c0_65, %c0_66] : memref<1x4x8x8xbf16, #tpu.memory_space<vmem>>, vector<1x1x8x8xbf16>
    %79 = vector.shape_cast %78 : vector<1x1x8x8xbf16> to vector<8x8xbf16>
    %80 = vector.shape_cast %77 : vector<8x8xbf16> to vector<1x1x8x8xbf16>
    tpu.vector_store %arg13[%c0_63, %c3_64, %c0_65, %c0_66], %80 {strides = array<i32>} : memref<1x4x8x8xbf16, #tpu.memory_space<vmem>>, vector<1x1x8x8xbf16>,
    return
  }
  func.func @transform_0(%arg0: i32, %arg1: i32) -> (i32, i32, i32) {
    %c0_i32 = arith.constant 0 : i32
    %c0_i32_0 = arith.constant 0 : i32
    return %arg0, %arg1, %c0_i32 : i32, i32, i32
  }
  func.func @transform_1(%arg0: i32, %arg1: i32) -> (i32, i32, i32) {
    %c0_i32 = arith.constant 0 : i32
    %c0_i32_0 = arith.constant 0 : i32
    return %arg0, %arg1, %c0_i32 : i32, i32, i32
  }
  func.func @transform_2(%arg0: i32, %arg1: i32) -> (i32, i32, i32) {
    %c0_i32 = arith.constant 0 : i32
    %c0_i32_0 = arith.constant 0 : i32
    return %arg0, %arg1, %c0_i32 : i32, i32, i32
  }
  func.func @transform_3(%arg0: i32, %arg1: i32) -> (i32, i32) {
    %c0_i32 = arith.constant 0 : i32
    %c0_i32_0 = arith.constant 0 : i32
    %c0_i32_1 = arith.constant 0 : i32
    return %c0_i32, %c0_i32_0 : i32, i32
  }
  func.func @transform_4(%arg0: i32, %arg1: i32) -> (i32, i32) {
    %c0_i32 = arith.constant 0 : i32
    %c0_i32_0 = arith.constant 0 : i32
    %c0_i32_1 = arith.constant 0 : i32
    return %c0_i32, %c0_i32_0 : i32, i32
  }
  func.func @transform_5(%arg0: i32, %arg1: i32) -> (i32, i32) {
    %c0_i32 = arith.constant 0 : i32
    %c0_i32_0 = arith.constant 0 : i32
    %c0_i32_1 = arith.constant 0 : i32
    return %c0_i32, %c0_i32_0 : i32, i32
  }
  func.func @transform_6(%arg0: i32, %arg1: i32) -> (i32, i32) {
    %c0_i32 = arith.constant 0 : i32
    %c0_i32_0 = arith.constant 0 : i32
    %c0_i32_1 = arith.constant 0 : i32
    return %c0_i32, %c0_i32_0 : i32, i32
  }
  func.func @transform_7(%arg0: i32, %arg1: i32) -> (i32, i32) {
    %c0_i32 = arith.constant 0 : i32
    %c0_i32_0 = arith.constant 0 : i32
    %c0_i32_1 = arith.constant 0 : i32
    return %c0_i32, %c0_i32_0 : i32, i32
  }
  func.func @transform_8(%arg0: i32, %arg1: i32) -> (i32, i32) {
    %c0_i32 = arith.constant 0 : i32
    %c0_i32_0 = arith.constant 0 : i32
    %c0_i32_1 = arith.constant 0 : i32
    return %c0_i32, %c0_i32_0 : i32, i32
  }
  func.func @transform_9(%arg0: i32, %arg1: i32) -> (i32, i32, i32, i32) {
    %c0_i32 = arith.constant 0 : i32
    %c0_i32_0 = arith.constant 0 : i32
    %c0_i32_1 = arith.constant 0 : i32
    return %arg0, %c0_i32, %arg1, %c0_i32_0 : i32, i32, i32, i32
  }
  func.func @transform_10(%arg0: i32, %arg1: i32) -> (i32, i32, i32, i32) {
    %c0_i32 = arith.constant 0 : i32
    %c0_i32_0 = arith.constant 0 : i32
    %c0_i32_1 = arith.constant 0 : i32
    return %arg0, %c0_i32, %arg1, %c0_i32_0 : i32, i32, i32, i32
  }
  func.func @transform_11(%arg0: i32, %arg1: i32) -> (i32, i32, i32, i32) {
    %c0_i32 = arith.constant 0 : i32
    %c0_i32_0 = arith.constant 0 : i32
    %c0_i32_1 = arith.constant 0 : i32
    return %arg0, %c0_i32, %arg1, %c0_i32_0 : i32, i32, i32, i32
  }
}

</mosaic_0001>

<llo_original>
// kernel: tpu_custom_call.1
$region0: #{tpu_custom_call.1}
  #allocation0 [shape = 'u32[]', space=smem, size = 0x4, offset = 0x4, fixed_abs, tag = 'smem constant byte address 0x4 - core index']
  #allocation1 [shape = 'u32[144,128]{1,0:T(1,128)}', space=vmem, size = 0x12000, scoped, tag = 'internal scratch']
  %s0 = inlined_call_operand.hbm [shape: f32[2,8,32], index: 0, kind: input, shape index: {}]
  %s1 = inlined_call_operand.hbm [shape: f32[2,8,32], index: 1, kind: input, shape index: {}]
  %s2 = inlined_call_operand.hbm [shape: f32[2,8,32], index: 2, kind: input, shape index: {}]
  %s3 = inlined_call_operand.hbm [shape: f32[32,32], index: 3, kind: input, shape index: {}]
  %s4 = inlined_call_operand.vmem [shape: f32[1,32], index: 4, kind: input, shape index: {}]
  %s5 = inlined_call_operand.hbm [shape: f32[32,32], index: 5, kind: input, shape index: {}]
  %s6 = inlined_call_operand.vmem [shape: f32[1,32], index: 6, kind: input, shape index: {}]
  %s7 = inlined_call_operand.hbm [shape: f32[32,32], index: 7, kind: input, shape index: {}]
  %s8 = inlined_call_operand.vmem [shape: f32[1,32], index: 8, kind: input, shape index: {}]
  %s9 = inlined_call_operand.hbm [shape: bf16[2,4,8,8], index: 9, kind: output, shape index: {0}]
  %s10 = inlined_call_operand.hbm [shape: bf16[2,4,8,8], index: 10, kind: output, shape index: {1}]
  %s11 = inlined_call_operand.hbm [shape: bf16[2,4,8,8], index: 11, kind: output, shape index: {2}]
  %12 = xla_tuple %s9, %s10, %s11
  %s13 = sld [smem:[#allocation0]]
  $region109: #{tpu_custom_call.1} parent=0
    _
  %s15 = ssub.s32 1, %s13
  %s16 = scalar_select 0, %s15, %s13
  $region1: #{tpu_custom_call.1} parent=0
    #allocation2 [shape = 'u8[8192]{0}', space=vmem, size = 0x2000, scoped, tag = 'input window, operand 0']
    #allocation3 [shape = 's32[2]{0}', space=sflag, size = 0x8, scoped, tag = 'scoped memory for tpu_custom_call.1']
    #allocation4 [shape = 's32[2]{0}', space=sflag, size = 0x8, scoped, tag = 'scoped memory for tpu_custom_call.1']
    #allocation5 [shape = 'u8[8192]{0}', space=vmem, size = 0x2000, scoped, tag = 'input window, operand 1']
    #allocation6 [shape = 's32[2]{0}', space=sflag, size = 0x8, scoped, tag = 'scoped memory for tpu_custom_call.1']
    #allocation7 [shape = 'u8[8192]{0}', space=vmem, size = 0x2000, scoped, tag = 'input window, operand 2']
    #allocation8 [shape = 'u8[16384]{0}', space=vmem, size = 0x4000, scoped, tag = 'input window, operand 3, single buffered']
    #allocation9 [shape = 's32[1]{0}', space=sflag, size = 0x4, scoped, tag = 'scoped memory for tpu_custom_call.1']
    #allocation10 [shape = 'u8[16384]{0}', space=vmem, size = 0x4000, scoped, tag = 'input window, operand 5, single buffered']
    #allocation11 [shape = 'u8[16384]{0}', space=vmem, size = 0x4000, scoped, tag = 'input window, operand 7, single buffered']
    #allocation12 [shape = 's32[1]{0}', space=sflag, size = 0x4, scoped, tag = 'scoped memory for tpu_custom_call.1']
    #allocation13 [shape = 'u8[16384]{0}', space=vmem, size = 0x4000, scoped, tag = 'output window, operand 0']
    #allocation14 [shape = 'u8[16384]{0}', space=vmem, size = 0x4000, scoped, tag = 'output window, operand 1']
    #allocation15 [shape = 's32[2]{0}', space=sflag, size = 0x8, scoped, tag = 'scoped memory for tpu_custom_call.1']
    #allocation16 [shape = 'u8[16384]{0}', space=vmem, size = 0x4000, scoped, tag = 'output window, operand 2']
    %17 = vsyncpa [#allocation3], 0
    %s18 = scalar_lea.sflag [#allocation3], 1
    %19 = vsyncpa %s18, 0
    %20 = vsyncpa [#allocation6], 0
    %s21 = scalar_lea.sflag [#allocation6], 1
    %22 = vsyncpa %s21, 0
    %23 = vsyncpa [#allocation9], 0
    %24 = vsyncpa [#allocation12], 0
    %25 = vsyncpa [#allocation4], 0
    %s26 = scalar_lea.sflag [#allocation4], 1
    %27 = vsyncpa %s26, 0
    %28 = vsyncpa [#allocation15], 0
    %s29 = scalar_lea.sflag [#allocation15], 1
    %30 = vsyncpa %s29, 0
    loop: start=0, step=1, limit=4
    $region2: #{tpu_custom_call.1} parent=1 // loop_pre_header
      _
    $region3: #{tpu_custom_call.1} parent=1 // loop_header
      %s32 = sphi 0, %s36
      %p33 = scmp.ge.s32.totalorder %s32, 4
      %s39 = sphi 0, %s51
      %s40 = sphi 0, %s47
      %s41 = sphi 0, %s39
      %s42 = sphi 0, %s40
      %s43 = sphi 0, %s41
      %s44 = sphi 0, %s42
      %s56 = sphi 0, %s58
      %s59 = sphi 0, %s56
      %s60 = sphi 0, %s59
      %s76 = sphi 0, %s60
      %s84 = sphi 0, %s86
      %s87 = sphi 0, %s84
      %s88 = sphi 0, %s87
      %s104 = sphi 0, %s88
      %s112 = sphi 0, %s114
      %s115 = sphi 0, %s112
      %s116 = sphi 0, %s115
      %s132 = sphi 0, %s116
      %s136 = sphi 0, %s136
      %s138 = sphi 0, %s136
      %s139 = sphi 0, %s138
      %s153 = sphi 0, %s139
      %s157 = sphi 0, %s157
      %s159 = sphi 0, %s157
      %s160 = sphi 0, %s159
      %s174 = sphi 0, %s160
      %s178 = sphi 0, %s178
      %s180 = sphi 0, %s178
      %s181 = sphi 0, %s180
      %s195 = sphi 0, %s181
      %s199 = sphi 0, %s199
      %s201 = sphi 0, %s199
      %s202 = sphi 0, %s201
      %s216 = sphi 0, %s202
      %s220 = sphi 0, %s220
      %s222 = sphi 0, %s220
      %s223 = sphi 0, %s222
      %s237 = sphi 0, %s223
      %s241 = sphi 0, %s241
      %s243 = sphi 0, %s241
      %s244 = sphi 0, %s243
      %s258 = sphi 0, %s244
      %s266 = sphi 0, %s268
      %s269 = sphi 0, %s266
      %s270 = sphi 0, %s269
      %s286 = sphi 0, %s270
      %s294 = sphi 0, %s296
      %s297 = sphi 0, %s294
      %s298 = sphi 0, %s297
      %s314 = sphi 0, %s298
      %s322 = sphi 0, %s324
      %s325 = sphi 0, %s322
      %s326 = sphi 0, %s325
      %s342 = sphi 0, %s326
    $region4: #{tpu_custom_call.1} parent=1 // loop_header_branch
      %35 = sbr.rel (%p33) target = $region8
    $region5: #{tpu_custom_call.1} parent=1 // loop_body
      %s37 = ssub.s32 %s32, 1
      %s38 = ssub.s32 %s32, 2
      %s45 = sadd.s32 1, %s40
      %p46 = scmp.ge.s32.totalorder %s45, 1
      %s47 = scalar_select %p46, 0, %s45
      %s48 = sadd.s32 1, %s39
      %s49 = scalar_select %p46, %s48, %s39
      %p50 = scmp.ge.s32.totalorder %s49, 2
      %s51 = scalar_select %p50, 0, %s49
      %s52 = ssub.s32 %s39, %s51
      %s53 = ssub.s32 %s40, %s47
      %s54 = sor.u32 %s52, %s53
      %p55 = scmp.eq.s32.totalorder %s54, 0
      %s57 = sadd.s32 %s56, 1
      %s58 = scalar_select %p55, %s56, %s57
      %p61 = pneg %p55
      %p62 = scmp.eq.s32.totalorder %s32, 1
      %p63 = por %p61, %p62
      %p64 = scmp.ne.s32.totalorder %s56, %s59
      %p65 = scmp.eq.s32.totalorder %s32, 0
      %p66 = por %p64, %p65
      %p67 = scmp.ne.s32.totalorder %s56, %s59
      %p68 = scmp.eq.s32.totalorder %s37, 1
      %p69 = por %p67, %p68
      %p70 = scmp.ne.s32.totalorder %s59, %s60
      %p71 = scmp.eq.s32.totalorder %s37, 0
      %p72 = por %p70, %p71
      %p73 = scmp.ne.s32.totalorder %s59, %s60
      %p74 = scmp.eq.s32.totalorder %s38, 1
      %p75 = por %p73, %p74
      %p77 = scmp.ne.s32.totalorder %s60, %s76
      %p78 = scmp.eq.s32.totalorder %s38, 0
      %p79 = por %p77, %p78
      %s80 = ssub.s32 %s39, %s51
      %s81 = ssub.s32 %s40, %s47
      %s82 = sor.u32 %s80, %s81
      %p83 = scmp.eq.s32.totalorder %s82, 0
      %s85 = sadd.s32 %s84, 1
      %s86 = scalar_select %p83, %s84, %s85
      %p89 = pneg %p83
      %p90 = scmp.eq.s32.totalorder %s32, 1
      %p91 = por %p89, %p90
      %p92 = scmp.ne.s32.totalorder %s84, %s87
      %p93 = scmp.eq.s32.totalorder %s32, 0
      %p94 = por %p92, %p93
      %p95 = scmp.ne.s32.totalorder %s84, %s87
      %p96 = scmp.eq.s32.totalorder %s37, 1
      %p97 = por %p95, %p96
      %p98 = scmp.ne.s32.totalorder %s87, %s88
      %p99 = scmp.eq.s32.totalorder %s37, 0
      %p100 = por %p98, %p99
      %p101 = scmp.ne.s32.totalorder %s87, %s88
      %p102 = scmp.eq.s32.totalorder %s38, 1
      %p103 = por %p101, %p102
      %p105 = scmp.ne.s32.totalorder %s88, %s104
      %p106 = scmp.eq.s32.totalorder %s38, 0
      %p107 = por %p105, %p106
      %s108 = ssub.s32 %s39, %s51
      %s109 = ssub.s32 %s40, %s47
      %s110 = sor.u32 %s108, %s109
      %p111 = scmp.eq.s32.totalorder %s110, 0
      %s113 = sadd.s32 %s112, 1
      %s114 = scalar_select %p111, %s112, %s113
      %p117 = pneg %p111
      %p118 = scmp.eq.s32.totalorder %s32, 1
      %p119 = por %p117, %p118
      %p120 = scmp.ne.s32.totalorder %s112, %s115
      %p121 = scmp.eq.s32.totalorder %s32, 0
      %p122 = por %p120, %p121
      %p123 = scmp.ne.s32.totalorder %s112, %s115
      %p124 = scmp.eq.s32.totalorder %s37, 1
      %p125 = por %p123, %p124
      %p126 = scmp.ne.s32.totalorder %s115, %s116
      %p127 = scmp.eq.s32.totalorder %s37, 0
      %p128 = por %p126, %p127
      %p129 = scmp.ne.s32.totalorder %s115, %s116
      %p130 = scmp.eq.s32.totalorder %s38, 1
      %p131 = por %p129, %p130
      %p133 = scmp.ne.s32.totalorder %s116, %s132
      %p134 = scmp.eq.s32.totalorder %s38, 0
      %p135 = por %p133, %p134
      %s137 = sadd.s32 %s136, 1
      %p140 = scmp.eq.s32.totalorder %s32, 1
      %p141 = scmp.ne.s32.totalorder %s136, %s138
      %p142 = scmp.eq.s32.totalorder %s32, 0
      %p143 = por %p141, %p142
      %p144 = scmp.ne.s32.totalorder %s136, %s138
      %p145 = scmp.eq.s32.totalorder %s37, 1
      %p146 = por %p144, %p145
      %p147 = scmp.ne.s32.totalorder %s138, %s139
      %p148 = scmp.eq.s32.totalorder %s37, 0
      %p149 = por %p147, %p148
      %p150 = scmp.ne.s32.totalorder %s138, %s139
      %p151 = scmp.eq.s32.totalorder %s38, 1
      %p152 = por %p150, %p151
      %p154 = scmp.ne.s32.totalorder %s139, %s153
      %p155 = scmp.eq.s32.totalorder %s38, 0
      %p156 = por %p154, %p155
      %s158 = sadd.s32 %s157, 1
      %p161 = scmp.eq.s32.totalorder %s32, 1
      %p162 = scmp.ne.s32.totalorder %s157, %s159
      %p163 = scmp.eq.s32.totalorder %s32, 0
      %p164 = por %p162, %p163
      %p165 = scmp.ne.s32.totalorder %s157, %s159
      %p166 = scmp.eq.s32.totalorder %s37, 1
      %p167 = por %p165, %p166
      %p168 = scmp.ne.s32.totalorder %s159, %s160
      %p169 = scmp.eq.s32.totalorder %s37, 0
      %p170 = por %p168, %p169
      %p171 = scmp.ne.s32.totalorder %s159, %s160
      %p172 = scmp.eq.s32.totalorder %s38, 1
      %p173 = por %p171, %p172
      %p175 = scmp.ne.s32.totalorder %s160, %s174
      %p176 = scmp.eq.s32.totalorder %s38, 0
      %p177 = por %p175, %p176
      %s179 = sadd.s32 %s178, 1
      %p182 = scmp.eq.s32.totalorder %s32, 1
      %p183 = scmp.ne.s32.totalorder %s178, %s180
      %p184 = scmp.eq.s32.totalorder %s32, 0
      %p185 = por %p183, %p184
      %p186 = scmp.ne.s32.totalorder %s178, %s180
      %p187 = scmp.eq.s32.totalorder %s37, 1
      %p188 = por %p186, %p187
      %p189 = scmp.ne.s32.totalorder %s180, %s181
      %p190 = scmp.eq.s32.totalorder %s37, 0
      %p191 = por %p189, %p190
      %p192 = scmp.ne.s32.totalorder %s180, %s181
      %p193 = scmp.eq.s32.totalorder %s38, 1
      %p194 = por %p192, %p193
      %p196 = scmp.ne.s32.totalorder %s181, %s195
      %p197 = scmp.eq.s32.totalorder %s38, 0
      %p198 = por %p196, %p197
      %s200 = sadd.s32 %s199, 1
      %p203 = scmp.eq.s32.totalorder %s32, 1
      %p204 = scmp.ne.s32.totalorder %s199, %s201
      %p205 = scmp.eq.s32.totalorder %s32, 0
      %p206 = por %p204, %p205
      %p207 = scmp.ne.s32.totalorder %s199, %s201
      %p208 = scmp.eq.s32.totalorder %s37, 1
      %p209 = por %p207, %p208
      %p210 = scmp.ne.s32.totalorder %s201, %s202
      %p211 = scmp.eq.s32.totalorder %s37, 0
      %p212 = por %p210, %p211
      %p213 = scmp.ne.s32.totalorder %s201, %s202
      %p214 = scmp.eq.s32.totalorder %s38, 1
      %p215 = por %p213, %p214
      %p217 = scmp.ne.s32.totalorder %s202, %s216
      %p218 = scmp.eq.s32.totalorder %s38, 0
      %p219 = por %p217, %p218
      %s221 = sadd.s32 %s220, 1
      %p224 = scmp.eq.s32.totalorder %s32, 1
      %p225 = scmp.ne.s32.totalorder %s220, %s222
      %p226 = scmp.eq.s32.totalorder %s32, 0
      %p227 = por %p225, %p226
      %p228 = scmp.ne.s32.totalorder %s220, %s222
      %p229 = scmp.eq.s32.totalorder %s37, 1
      %p230 = por %p228, %p229
      %p231 = scmp.ne.s32.totalorder %s222, %s223
      %p232 = scmp.eq.s32.totalorder %s37, 0
      %p233 = por %p231, %p232
      %p234 = scmp.ne.s32.totalorder %s222, %s223
      %p235 = scmp.eq.s32.totalorder %s38, 1
      %p236 = por %p234, %p235
      %p238 = scmp.ne.s32.totalorder %s223, %s237
      %p239 = scmp.eq.s32.totalorder %s38, 0
      %p240 = por %p238, %p239
      %s242 = sadd.s32 %s241, 1
      %p245 = scmp.eq.s32.totalorder %s32, 1
      %p246 = scmp.ne.s32.totalorder %s241, %s243
      %p247 = scmp.eq.s32.totalorder %s32, 0
      %p248 = por %p246, %p247
      %p249 = scmp.ne.s32.totalorder %s241, %s243
      %p250 = scmp.eq.s32.totalorder %s37, 1
      %p251 = por %p249, %p250
      %p252 = scmp.ne.s32.totalorder %s243, %s244
      %p253 = scmp.eq.s32.totalorder %s37, 0
      %p254 = por %p252, %p253
      %p255 = scmp.ne.s32.totalorder %s243, %s244
      %p256 = scmp.eq.s32.totalorder %s38, 1
      %p257 = por %p255, %p256
      %p259 = scmp.ne.s32.totalorder %s244, %s258
      %p260 = scmp.eq.s32.totalorder %s38, 0
      %p261 = por %p259, %p260
      %s262 = ssub.s32 %s39, %s51
      %s263 = ssub.s32 %s40, %s47
      %s264 = sor.u32 %s262, %s263
      %p265 = scmp.eq.s32.totalorder %s264, 0
      %s267 = sadd.s32 %s266, 1
      %s268 = scalar_select %p265, %s266, %s267
      %p271 = pneg %p265
      %p272 = scmp.eq.s32.totalorder %s32, 1
      %p273 = por %p271, %p272
      %p274 = scmp.ne.s32.totalorder %s266, %s269
      %p275 = scmp.eq.s32.totalorder %s32, 0
      %p276 = por %p274, %p275
      %p277 = scmp.ne.s32.totalorder %s266, %s269
      %p278 = scmp.eq.s32.totalorder %s37, 1
      %p279 = por %p277, %p278
      %p280 = scmp.ne.s32.totalorder %s269, %s270
      %p281 = scmp.eq.s32.totalorder %s37, 0
      %p282 = por %p280, %p281
      %p283 = scmp.ne.s32.totalorder %s269, %s270
      %p284 = scmp.eq.s32.totalorder %s38, 1
      %p285 = por %p283, %p284
      %p287 = scmp.ne.s32.totalorder %s270, %s286
      %p288 = scmp.eq.s32.totalorder %s38, 0
      %p289 = por %p287, %p288
      %s290 = ssub.s32 %s39, %s51
      %s291 = ssub.s32 %s40, %s47
      %s292 = sor.u32 %s290, %s291
      %p293 = scmp.eq.s32.totalorder %s292, 0
      %s295 = sadd.s32 %s294, 1
      %s296 = scalar_select %p293, %s294, %s295
      %p299 = pneg %p293
      %p300 = scmp.eq.s32.totalorder %s32, 1
      %p301 = por %p299, %p300
      %p302 = scmp.ne.s32.totalorder %s294, %s297
      %p303 = scmp.eq.s32.totalorder %s32, 0
      %p304 = por %p302, %p303
      %p305 = scmp.ne.s32.totalorder %s294, %s297
      %p306 = scmp.eq.s32.totalorder %s37, 1
      %p307 = por %p305, %p306
      %p308 = scmp.ne.s32.totalorder %s297, %s298
      %p309 = scmp.eq.s32.totalorder %s37, 0
      %p310 = por %p308, %p309
      %p311 = scmp.ne.s32.totalorder %s297, %s298
      %p312 = scmp.eq.s32.totalorder %s38, 1
      %p313 = por %p311, %p312
      %p315 = scmp.ne.s32.totalorder %s298, %s314
      %p316 = scmp.eq.s32.totalorder %s38, 0
      %p317 = por %p315, %p316
      %s318 = ssub.s32 %s39, %s51
      %s319 = ssub.s32 %s40, %s47
      %s320 = sor.u32 %s318, %s319
      %p321 = scmp.eq.s32.totalorder %s320, 0
      %s323 = sadd.s32 %s322, 1
      %s324 = scalar_select %p321, %s322, %s323
      %p327 = pneg %p321
      %p328 = scmp.eq.s32.totalorder %s32, 1
      %p329 = por %p327, %p328
      %p330 = scmp.ne.s32.totalorder %s322, %s325
      %p331 = scmp.eq.s32.totalorder %s32, 0
      %p332 = por %p330, %p331
      %p333 = scmp.ne.s32.totalorder %s322, %s325
      %p334 = scmp.eq.s32.totalorder %s37, 1
      %p335 = por %p333, %p334
      %p336 = scmp.ne.s32.totalorder %s325, %s326
      %p337 = scmp.eq.s32.totalorder %s37, 0
      %p338 = por %p336, %p337
      %p339 = scmp.ne.s32.totalorder %s325, %s326
      %p340 = scmp.eq.s32.totalorder %s38, 1
      %p341 = por %p339, %p340
      %p343 = scmp.ne.s32.totalorder %s326, %s342
      %p344 = scmp.eq.s32.totalorder %s38, 0
      %p345 = por %p343, %p344
      %p346 = scmp.le.s32.totalorder 1, %s32
      %p347 = scmp.lt.s32.totalorder %s32, 3
      %p348 = pnand %p346, %p347
      %p349 = pneg %p348
      // Predicated region
      $region9: #{tpu_custom_call.1} parent=5 // pred_check
        _
      $region10: #{tpu_custom_call.1} parent=5 // pred_check_branch
        %351 = sbr.rel (%p348) target = $region12
      $region11: #{tpu_custom_call.1} parent=5 // pred_region
        %s352 = ssub.s32 %s32, 1
        // Predicated region
        $region13: #{tpu_custom_call.1} parent=11 // pred_check
          %p353 = pneg %p149
        $region14: #{tpu_custom_call.1} parent=11 // pred_check_branch
          %355 = sbr.rel (%p353) target = $region16
        $region15: #{tpu_custom_call.1} parent=11 // pred_region
          %s357 = ssub.s32 512, 512
          %358 = vsyncadd [#allocation9], %s357
          %s359 = sshll.u32 [#allocation8], 4
          %s360 = int_to_ptr.vmem [resolvable:$true] %s359
          %365 = dma.hbm_to_vmem [thread:$0]  %s3, 512, %s360, [#allocation9], 128, 128, 8
        $region16: #{tpu_custom_call.1} parent=11 // pred_fallthru
          _
        // Predicated region
        $region17: #{tpu_custom_call.1} parent=11 // pred_check
          %p366 = pneg %p170
        $region18: #{tpu_custom_call.1} parent=11 // pred_check_branch
          %368 = sbr.rel (%p366) target = $region20
        $region19: #{tpu_custom_call.1} parent=11 // pred_region
          _
        $region20: #{tpu_custom_call.1} parent=11 // pred_fallthru
          _
        // Predicated region
        $region21: #{tpu_custom_call.1} parent=11 // pred_check
          %p369 = pneg %p191
        $region22: #{tpu_custom_call.1} parent=11 // pred_check_branch
          %371 = sbr.rel (%p369) target = $region24
        $region23: #{tpu_custom_call.1} parent=11 // pred_region
          %s373 = ssub.s32 512, 512
          %374 = vsyncadd [#allocation9], %s373
          %s375 = sshll.u32 [#allocation10], 4
          %s376 = int_to_ptr.vmem [resolvable:$true] %s375
          %381 = dma.hbm_to_vmem [thread:$0]  %s5, 512, %s376, [#allocation9], 128, 128, 8
        $region24: #{tpu_custom_call.1} parent=11 // pred_fallthru
          _
        // Predicated region
        $region25: #{tpu_custom_call.1} parent=11 // pred_check
          %p382 = pneg %p212
        $region26: #{tpu_custom_call.1} parent=11 // pred_check_branch
          %384 = sbr.rel (%p382) target = $region28
        $region27: #{tpu_custom_call.1} parent=11 // pred_region
          _
        $region28: #{tpu_custom_call.1} parent=11 // pred_fallthru
          _
        // Predicated region
        $region29: #{tpu_custom_call.1} parent=11 // pred_check
          %p385 = pneg %p233
        $region30: #{tpu_custom_call.1} parent=11 // pred_check_branch
          %387 = sbr.rel (%p385) target = $region32
        $region31: #{tpu_custom_call.1} parent=11 // pred_region
          %s389 = ssub.s32 512, 512
          %390 = vsyncadd [#allocation12], %s389
          %s391 = sshll.u32 [#allocation11], 4
          %s392 = int_to_ptr.vmem [resolvable:$true] %s391
          %397 = dma.hbm_to_vmem [thread:$0]  %s7, 512, %s392, [#allocation12], 128, 128, 8
        $region32: #{tpu_custom_call.1} parent=11 // pred_fallthru
          _
        // Predicated region
        $region33: #{tpu_custom_call.1} parent=11 // pred_check
          %p398 = pneg %p254
        $region34: #{tpu_custom_call.1} parent=11 // pred_check_branch
          %400 = sbr.rel (%p398) target = $region36
        $region35: #{tpu_custom_call.1} parent=11 // pred_region
          _
        $region36: #{tpu_custom_call.1} parent=11 // pred_fallthru
          _
      $region12: #{tpu_custom_call.1} parent=5 // pred_fallthru
        _
      %p401 = scmp.lt.s32.totalorder %s32, 2
      // Predicated region
      $region37: #{tpu_custom_call.1} parent=5 // pred_check
        %p402 = pneg %p401
      $region38: #{tpu_custom_call.1} parent=5 // pred_check_branch
        %404 = sbr.rel (%p402) target = $region40
      $region39: #{tpu_custom_call.1} parent=5 // pred_region
        // Predicated region
        $region41: #{tpu_custom_call.1} parent=39 // pred_check
          %p405 = pneg %p66
        $region42: #{tpu_custom_call.1} parent=39 // pred_check_branch
          %407 = sbr.rel (%p405) target = $region44
        $region43: #{tpu_custom_call.1} parent=39 // pred_region
          %s408 = sand.u32 %s56, 1
          %s409 = scalar_lea.sflag [#allocation3], %s408
          %s410 = sand.u32 %s56, 1
          %s411 = smul.addr %s410, 8
          %s412 = scalar_lea.vmem [#allocation2], %s411
          %s414 = ssub.s32 128, 128
          %415 = vsyncadd %s409, %s414
          %s416 = sadd.s32 %s40, %s39
          %s417 = smul.addr %s416, 128
          %s418 = scalar_lea.hbm %s0, %s417
          %s420 = sshll.u32 %s412, 4
          %s421 = int_to_ptr.vmem [resolvable:$true] %s420
          %423 = dma.hbm_to_vmem [thread:$0]  %s418, 128, %s421, %s409
        $region44: #{tpu_custom_call.1} parent=39 // pred_fallthru
          _
        // Predicated region
        $region45: #{tpu_custom_call.1} parent=39 // pred_check
          %p424 = pneg %p94
        $region46: #{tpu_custom_call.1} parent=39 // pred_check_branch
          %426 = sbr.rel (%p424) target = $region48
        $region47: #{tpu_custom_call.1} parent=39 // pred_region
          %s427 = sand.u32 %s32, 1
          %s428 = scalar_lea.sflag [#allocation6], %s427
          %s429 = sand.u32 %s84, 1
          %s430 = smul.addr %s429, 8
          %s431 = scalar_lea.vmem [#allocation5], %s430
          %s433 = ssub.s32 128, 128
          %434 = vsyncadd %s428, %s433
          %s435 = sadd.s32 %s40, %s39
          %s436 = smul.addr %s435, 128
          %s437 = scalar_lea.hbm %s1, %s436
          %s439 = sshll.u32 %s431, 4
          %s440 = int_to_ptr.vmem [resolvable:$true] %s439
          %442 = dma.hbm_to_vmem [thread:$0]  %s437, 128, %s440, %s428
        $region48: #{tpu_custom_call.1} parent=39 // pred_fallthru
          _
        // Predicated region
        $region49: #{tpu_custom_call.1} parent=39 // pred_check
          %p443 = pneg %p122
        $region50: #{tpu_custom_call.1} parent=39 // pred_check_branch
          %445 = sbr.rel (%p443) target = $region52
        $region51: #{tpu_custom_call.1} parent=39 // pred_region
          %s446 = sand.u32 %s32, 1
          %s447 = scalar_lea.sflag [#allocation6], %s446
          %s448 = sand.u32 %s112, 1
          %s449 = smul.addr %s448, 8
          %s450 = scalar_lea.vmem [#allocation7], %s449
          %s452 = ssub.s32 128, 128
          %453 = vsyncadd %s447, %s452
          %s454 = sadd.s32 %s40, %s39
          %s455 = smul.addr %s454, 128
          %s456 = scalar_lea.hbm %s2, %s455
          %s458 = sshll.u32 %s450, 4
          %s459 = int_to_ptr.vmem [resolvable:$true] %s458
          %461 = dma.hbm_to_vmem [thread:$0]  %s456, 128, %s459, %s447
        $region52: #{tpu_custom_call.1} parent=39 // pred_fallthru
          _
      $region40: #{tpu_custom_call.1} parent=5 // pred_fallthru
        _
      %p462 = scmp.le.s32.totalorder 1, %s32
      %p463 = scmp.lt.s32.totalorder %s32, 3
      %p464 = pnand %p462, %p463
      %p465 = pneg %p464
      // Predicated region
      $region53: #{tpu_custom_call.1} parent=5 // pred_check
        _
      $region54: #{tpu_custom_call.1} parent=5 // pred_check_branch
        %467 = sbr.rel (%p464) target = $region56
      $region55: #{tpu_custom_call.1} parent=5 // pred_region
        %s468 = ssub.s32 %s32, 1
        %s469 = sand.u32 %s59, 1
        %s470 = scalar_lea.sflag [#allocation3], %s469
        %s471 = sand.u32 %s59, 1
        %s472 = smul.addr %s471, 8
        %s473 = scalar_lea.vmem [#allocation2], %s472
        // Predicated region
        $region57: #{tpu_custom_call.1} parent=55 // pred_check
          %p474 = pneg %p72
        $region58: #{tpu_custom_call.1} parent=55 // pred_check_branch
          %476 = sbr.rel (%p474) target = $region60
        $region59: #{tpu_custom_call.1} parent=55 // pred_region
          %477 = dma.done %s470, 128
        $region60: #{tpu_custom_call.1} parent=55 // pred_fallthru
          _
        %s478 = sand.u32 %s37, 1
        %s479 = scalar_lea.sflag [#allocation6], %s478
        %s480 = sand.u32 %s87, 1
        %s481 = smul.addr %s480, 8
        %s482 = scalar_lea.vmem [#allocation5], %s481
        // Predicated region
        $region61: #{tpu_custom_call.1} parent=55 // pred_check
          %p483 = pneg %p100
        $region62: #{tpu_custom_call.1} parent=55 // pred_check_branch
          %485 = sbr.rel (%p483) target = $region64
        $region63: #{tpu_custom_call.1} parent=55 // pred_region
          %486 = dma.done %s479, 128
        $region64: #{tpu_custom_call.1} parent=55 // pred_fallthru
          _
        %s487 = sand.u32 %s37, 1
        %s488 = scalar_lea.sflag [#allocation6], %s487
        %s489 = sand.u32 %s115, 1
        %s490 = smul.addr %s489, 8
        %s491 = scalar_lea.vmem [#allocation7], %s490
        // Predicated region
        $region65: #{tpu_custom_call.1} parent=55 // pred_check
          %p492 = pneg %p128
        $region66: #{tpu_custom_call.1} parent=55 // pred_check_branch
          %494 = sbr.rel (%p492) target = $region68
        $region67: #{tpu_custom_call.1} parent=55 // pred_region
          %495 = dma.done %s488, 128
        $region68: #{tpu_custom_call.1} parent=55 // pred_fallthru
          _
        // Predicated region
        $region69: #{tpu_custom_call.1} parent=55 // pred_check
          %p496 = pneg %p149
        $region70: #{tpu_custom_call.1} parent=55 // pred_check_branch
          %498 = sbr.rel (%p496) target = $region72
        $region71: #{tpu_custom_call.1} parent=55 // pred_region
          %499 = dma.done [#allocation9], 512
        $region72: #{tpu_custom_call.1} parent=55 // pred_fallthru
          _
        // Predicated region
        $region73: #{tpu_custom_call.1} parent=55 // pred_check
          %p500 = pneg %p191
        $region74: #{tpu_custom_call.1} parent=55 // pred_check_branch
          %502 = sbr.rel (%p500) target = $region76
        $region75: #{tpu_custom_call.1} parent=55 // pred_region
          %503 = dma.done [#allocation9], 512
        $region76: #{tpu_custom_call.1} parent=55 // pred_fallthru
          _
        // Predicated region
        $region77: #{tpu_custom_call.1} parent=55 // pred_check
          %p504 = pneg %p233
        $region78: #{tpu_custom_call.1} parent=55 // pred_check_branch
          %506 = sbr.rel (%p504) target = $region80
        $region79: #{tpu_custom_call.1} parent=55 // pred_region
          %507 = dma.done [#allocation12], 512
        $region80: #{tpu_custom_call.1} parent=55 // pred_fallthru
          _
        %s508 = sand.u32 %s59, 1
        %s509 = scalar_lea.sflag [#allocation3], %s508
        %s510 = sand.u32 %s59, 1
        %s511 = smul.addr %s510, 8
        %s512 = scalar_lea.vmem [#allocation2], %s511
        %p513 = pneg %p72
        %p514 = pneg %p69
        %s515 = sand.u32 %s37, 1
        %s516 = scalar_lea.sflag [#allocation6], %s515
        %s517 = sand.u32 %s87, 1
        %s518 = smul.addr %s517, 8
        %s519 = scalar_lea.vmem [#allocation5], %s518
        %p520 = pneg %p100
        %p521 = pneg %p97
        %s522 = sand.u32 %s37, 1
        %s523 = scalar_lea.sflag [#allocation6], %s522
        %s524 = sand.u32 %s115, 1
        %s525 = smul.addr %s524, 8
        %s526 = scalar_lea.vmem [#allocation7], %s525
        %p527 = pneg %p128
        %p528 = pneg %p125
        %p529 = pneg %p149
        %p530 = pneg %p146
        %p531 = pneg %p170
        %p532 = pneg %p167
        %p533 = pneg %p191
        %p534 = pneg %p188
        %p535 = pneg %p212
        %p536 = pneg %p209
        %p537 = pneg %p233
        %p538 = pneg %p230
        %p539 = pneg %p254
        %p540 = pneg %p251
        %p541 = pneg %p282
        %p542 = pneg %p279
        %s543 = sand.u32 %s269, 1
        %s544 = scalar_lea.sflag [#allocation4], %s543
        %s545 = sand.u32 %s269, 1
        %s546 = smul.addr %s545, 16
        %s547 = scalar_lea.vmem [#allocation13], %s546
        %p548 = pneg %p310
        %p549 = pneg %p307
        %s550 = sand.u32 %s37, 1
        %s551 = scalar_lea.sflag [#allocation15], %s550
        %s552 = sand.u32 %s297, 1
        %s553 = smul.addr %s552, 16
        %s554 = scalar_lea.vmem [#allocation14], %s553
        %p555 = pneg %p338
        %p556 = pneg %p335
        %s557 = sand.u32 %s37, 1
        %s558 = scalar_lea.sflag [#allocation15], %s557
        %s559 = sand.u32 %s325, 1
        %s560 = smul.addr %s559, 16
        %s561 = scalar_lea.vmem [#allocation16], %s560
        %v562 = vld [vmem:[%s473] sm:$0xff]
        %v563 = vld [vmem:[#allocation8] sm:$0xff]
        %v564 = vld [vmem:[#allocation8 + $0x8] sm:$0xff]
        %v565 = vld [vmem:[#allocation8 + $0x10] sm:$0xff]
        %v566 = vld [vmem:[#allocation8 + $0x18] sm:$0xff]
        %v567 = vld [vmem:[%s4] sm:$0x1]
        %v569 = vlaneseq
        %v570 = vshrl.u32 %v569, 7
        %v571 = vsub.s32 0, %v570
        %v572 = vrot.slane %v567, %v571
        %vm574 = vcmask 261120
        %v576 = vsel %vm574, %v562, 0
        %578 = vmatprep.subr.mxu0 0.0
        %579 = vmatpush1.msra.mxu0 0.0
        %580 = vmatprep.subr.mxu0 0.0
        %581 = vmatpush1.msra.mxu0 0.0
        %582 = vmatprep.subr.mxu0 0.0
        %583 = vmatpush1.msra.mxu0 0.0
        %584 = vmatprep.subr.mxu0 0.0
        %585 = vmatpush1.msra.mxu0 0.0
        %586 = vmatprep.subr.mxu0 0.0
        %587 = vmatpush1.msra.mxu0 0.0
        %588 = vmatprep.subr.mxu0 0.0
        %589 = vmatpush1.msra.mxu0 0.0
        %590 = vmatprep.subr.mxu0 0.0
        %591 = vmatpush1.msra.mxu0 0.0
        %592 = vmatprep.subr.mxu0 0.0
        %593 = vmatpush1.msra.mxu0 0.0
        %594 = vmatprep.subr.mxu0 0.0
        %595 = vmatpush1.msra.mxu0 0.0
        %596 = vmatprep.subr.mxu0 0.0
        %597 = vmatpush1.msra.mxu0 0.0
        %598 = vmatprep.subr.mxu0 0.0
        %599 = vmatpush1.msra.mxu0 0.0
        %600 = vmatprep.subr.mxu0 0.0
        %601 = vmatpush1.msra.mxu0 0.0
        %602 = vmatprep.subr.mxu0 0.0
        %603 = vmatpush1.msra.mxu0 %v566
        %604 = vmatprep.subr.mxu0 0.0
        %605 = vmatpush1.msra.mxu0 %v565
        %606 = vmatprep.subr.mxu0 0.0
        %607 = vmatpush1.msra.mxu0 %v564
        %608 = vmatprep.subr.mxu0 0.0
        %609 = vmatpush1.msra.mxu0 %v563
        %610 = vmatprep.subr.mxu0 0.0
        %611 = vmatpush2.msra.mxu0 0.0
        %612 = vmatprep.subr.mxu0 0.0
        %613 = vmatpush2.msra.mxu0 0.0
        %614 = vmatprep.subr.mxu0 0.0
        %615 = vmatpush2.msra.mxu0 0.0
        %616 = vmatprep.subr.mxu0 0.0
        %617 = vmatpush2.msra.mxu0 0.0
        %618 = vmatprep.subr.mxu0 0.0
        %619 = vmatpush2.msra.mxu0 0.0
        %620 = vmatprep.subr.mxu0 0.0
        %621 = vmatpush2.msra.mxu0 0.0
        %622 = vmatprep.subr.mxu0 0.0
        %623 = vmatpush2.msra.mxu0 0.0
        %624 = vmatprep.subr.mxu0 0.0
        %625 = vmatpush2.msra.mxu0 0.0
        %626 = vmatprep.subr.mxu0 0.0
        %627 = vmatpush2.msra.mxu0 0.0
        %628 = vmatprep.subr.mxu0 0.0
        %629 = vmatpush2.msra.mxu0 0.0
        %630 = vmatprep.subr.mxu0 0.0
        %631 = vmatpush2.msra.mxu0 0.0
        %632 = vmatprep.subr.mxu0 0.0
        %633 = vmatpush2.msra.mxu0 0.0
        %634 = vmatprep.subr.mxu0 0.0
        %635 = vmatpush2.msra.mxu0 0.0
        %636 = vmatprep.subr.mxu0 0.0
        %637 = vmatpush2.msra.mxu0 0.0
        %638 = vmatprep.subr.mxu0 0.0
        %639 = vmatpush2.msra.mxu0 0.0
        %640 = vmatprep.subr.mxu0 0.0
        %641 = vmatpush2.msra.mxu0 0.0
        %642 = vmatprep.mubr.f32.mxu0 0.0
        %643 = vmatmul.mubr.f32.gmra.mxu0 %v576
        %v644 = vpop.f32.mrf.mxu0
        %v645 = vadd.f32 %v572, %v644
        %v646 = vpop.f32.mrf.mxu0
        %647 = vdwg.mxu0
        %v648 = vpack.c.bf16 %v645, %v645
        %vm649 = vcmask 60416
        %650 = vst.msk [vmem:[%s547] sm:$0xf] %vm649, %v648
        %v652 = vunpack.c.l.b16 %v648
        %v653 = vpack.c.b16 %v652, %v652
        %654 = vrot.lane.b32.xlu0 %v653, 120
        %v655 = vpop.permute.xlu0 %654
        %s657 = scalar_lea.vmem %s547, 4 [#allocation13]
        %658 = vst.msk [vmem:[%s657] sm:$0xf] %vm649, %v655
        %659 = vrot.lane.b32.xlu0 %v653, 112
        %v660 = vpop.permute.xlu0 %659
        %s662 = scalar_lea.vmem %s547, 8 [#allocation13]
        %663 = vst.msk [vmem:[%s662] sm:$0xf] %vm649, %v660
        %664 = vrot.lane.b32.xlu0 %v653, 104
        %v665 = vpop.permute.xlu0 %664
        %s667 = scalar_lea.vmem %s547, 12 [#allocation13]
        %668 = vst.msk [vmem:[%s667] sm:$0xf] %vm649, %v665
        %v669 = vld [vmem:[%s482] sm:$0xff]
        %v670 = vld [vmem:[#allocation10] sm:$0xff]
        %v671 = vld [vmem:[#allocation10 + $0x8] sm:$0xff]
        %v672 = vld [vmem:[#allocation10 + $0x10] sm:$0xff]
        %v673 = vld [vmem:[#allocation10 + $0x18] sm:$0xff]
        %v674 = vld [vmem:[%s6] sm:$0x1]
        %v676 = vlaneseq
        %v677 = vshrl.u32 %v676, 7
        %v678 = vsub.s32 0, %v677
        %v679 = vrot.slane %v674, %v678
        %v682 = vsel %vm574, %v669, 0
        %684 = vmatprep.subr.mxu0 0.0
        %685 = vmatpush1.msra.mxu0 0.0
        %686 = vmatprep.subr.mxu0 0.0
        %687 = vmatpush1.msra.mxu0 0.0
        %688 = vmatprep.subr.mxu0 0.0
        %689 = vmatpush1.msra.mxu0 0.0
        %690 = vmatprep.subr.mxu0 0.0
        %691 = vmatpush1.msra.mxu0 0.0
        %692 = vmatprep.subr.mxu0 0.0
        %693 = vmatpush1.msra.mxu0 0.0
        %694 = vmatprep.subr.mxu0 0.0
        %695 = vmatpush1.msra.mxu0 0.0
        %696 = vmatprep.subr.mxu0 0.0
        %697 = vmatpush1.msra.mxu0 0.0
        %698 = vmatprep.subr.mxu0 0.0
        %699 = vmatpush1.msra.mxu0 0.0
        %700 = vmatprep.subr.mxu0 0.0
        %701 = vmatpush1.msra.mxu0 0.0
        %702 = vmatprep.subr.mxu0 0.0
        %703 = vmatpush1.msra.mxu0 0.0
        %704 = vmatprep.subr.mxu0 0.0
        %705 = vmatpush1.msra.mxu0 0.0
        %706 = vmatprep.subr.mxu0 0.0
        %707 = vmatpush1.msra.mxu0 0.0
        %708 = vmatprep.subr.mxu0 0.0
        %709 = vmatpush1.msra.mxu0 %v673
        %710 = vmatprep.subr.mxu0 0.0
        %711 = vmatpush1.msra.mxu0 %v672
        %712 = vmatprep.subr.mxu0 0.0
        %713 = vmatpush1.msra.mxu0 %v671
        %714 = vmatprep.subr.mxu0 0.0
        %715 = vmatpush1.msra.mxu0 %v670
        %716 = vmatprep.subr.mxu0 0.0
        %717 = vmatpush2.msra.mxu0 0.0
        %718 = vmatprep.subr.mxu0 0.0
        %719 = vmatpush2.msra.mxu0 0.0
        %720 = vmatprep.subr.mxu0 0.0
        %721 = vmatpush2.msra.mxu0 0.0
        %722 = vmatprep.subr.mxu0 0.0
        %723 = vmatpush2.msra.mxu0 0.0
        %724 = vmatprep.subr.mxu0 0.0
        %725 = vmatpush2.msra.mxu0 0.0
        %726 = vmatprep.subr.mxu0 0.0
        %727 = vmatpush2.msra.mxu0 0.0
        %728 = vmatprep.subr.mxu0 0.0
        %729 = vmatpush2.msra.mxu0 0.0
        %730 = vmatprep.subr.mxu0 0.0
        %731 = vmatpush2.msra.mxu0 0.0
        %732 = vmatprep.subr.mxu0 0.0
        %733 = vmatpush2.msra.mxu0 0.0
        %734 = vmatprep.subr.mxu0 0.0
        %735 = vmatpush2.msra.mxu0 0.0
        %736 = vmatprep.subr.mxu0 0.0
        %737 = vmatpush2.msra.mxu0 0.0
        %738 = vmatprep.subr.mxu0 0.0
        %739 = vmatpush2.msra.mxu0 0.0
        %740 = vmatprep.subr.mxu0 0.0
        %741 = vmatpush2.msra.mxu0 0.0
        %742 = vmatprep.subr.mxu0 0.0
        %743 = vmatpush2.msra.mxu0 0.0
        %744 = vmatprep.subr.mxu0 0.0
        %745 = vmatpush2.msra.mxu0 0.0
        %746 = vmatprep.subr.mxu0 0.0
        %747 = vmatpush2.msra.mxu0 0.0
        %748 = vmatprep.mubr.f32.mxu0 0.0
        %749 = vmatmul.mubr.f32.gmra.mxu0 %v682
        %v750 = vpop.f32.mrf.mxu0
        %v751 = vadd.f32 %v679, %v750
        %v752 = vpop.f32.mrf.mxu0
        %753 = vdwg.mxu0
        %v754 = vpack.c.bf16 %v751, %v751
        %755 = vst.msk [vmem:[%s554] sm:$0xf] %vm649, %v754
        %v757 = vunpack.c.l.b16 %v754
        %v758 = vpack.c.b16 %v757, %v757
        %759 = vrot.lane.b32.xlu0 %v758, 120
        %v760 = vpop.permute.xlu0 %759
        %s762 = scalar_lea.vmem %s554, 4 [#allocation14]
        %763 = vst.msk [vmem:[%s762] sm:$0xf] %vm649, %v760
        %764 = vrot.lane.b32.xlu0 %v758, 112
        %v765 = vpop.permute.xlu0 %764
        %s767 = scalar_lea.vmem %s554, 8 [#allocation14]
        %768 = vst.msk [vmem:[%s767] sm:$0xf] %vm649, %v765
        %769 = vrot.lane.b32.xlu0 %v758, 104
        %v770 = vpop.permute.xlu0 %769
        %s772 = scalar_lea.vmem %s554, 12 [#allocation14]
        %773 = vst.msk [vmem:[%s772] sm:$0xf] %vm649, %v770
        %v774 = vld [vmem:[%s491] sm:$0xff]
        %v775 = vld [vmem:[#allocation11] sm:$0xff]
        %v776 = vld [vmem:[#allocation11 + $0x8] sm:$0xff]
        %v777 = vld [vmem:[#allocation11 + $0x10] sm:$0xff]
        %v778 = vld [vmem:[#allocation11 + $0x18] sm:$0xff]
        %v779 = vld [vmem:[%s8] sm:$0x1]
        %v781 = vlaneseq
        %v782 = vshrl.u32 %v781, 7
        %v783 = vsub.s32 0, %v782
        %v784 = vrot.slane %v779, %v783
        %v787 = vsel %vm574, %v774, 0
        %789 = vmatprep.subr.mxu0 0.0
        %790 = vmatpush1.msra.mxu0 0.0
        %791 = vmatprep.subr.mxu0 0.0
        %792 = vmatpush1.msra.mxu0 0.0
        %793 = vmatprep.subr.mxu0 0.0
        %794 = vmatpush1.msra.mxu0 0.0
        %795 = vmatprep.subr.mxu0 0.0
        %796 = vmatpush1.msra.mxu0 0.0
        %797 = vmatprep.subr.mxu0 0.0
        %798 = vmatpush1.msra.mxu0 0.0
        %799 = vmatprep.subr.mxu0 0.0
        %800 = vmatpush1.msra.mxu0 0.0
        %801 = vmatprep.subr.mxu0 0.0
        %802 = vmatpush1.msra.mxu0 0.0
        %803 = vmatprep.subr.mxu0 0.0
        %804 = vmatpush1.msra.mxu0 0.0
        %805 = vmatprep.subr.mxu0 0.0
        %806 = vmatpush1.msra.mxu0 0.0
        %807 = vmatprep.subr.mxu0 0.0
        %808 = vmatpush1.msra.mxu0 0.0
        %809 = vmatprep.subr.mxu0 0.0
        %810 = vmatpush1.msra.mxu0 0.0
        %811 = vmatprep.subr.mxu0 0.0
        %812 = vmatpush1.msra.mxu0 0.0
        %813 = vmatprep.subr.mxu0 0.0
        %814 = vmatpush1.msra.mxu0 %v778
        %815 = vmatprep.subr.mxu0 0.0
        %816 = vmatpush1.msra.mxu0 %v777
        %817 = vmatprep.subr.mxu0 0.0
        %818 = vmatpush1.msra.mxu0 %v776
        %819 = vmatprep.subr.mxu0 0.0
        %820 = vmatpush1.msra.mxu0 %v775
        %821 = vmatprep.subr.mxu0 0.0
        %822 = vmatpush2.msra.mxu0 0.0
        %823 = vmatprep.subr.mxu0 0.0
        %824 = vmatpush2.msra.mxu0 0.0
        %825 = vmatprep.subr.mxu0 0.0
        %826 = vmatpush2.msra.mxu0 0.0
        %827 = vmatprep.subr.mxu0 0.0
        %828 = vmatpush2.msra.mxu0 0.0
        %829 = vmatprep.subr.mxu0 0.0
        %830 = vmatpush2.msra.mxu0 0.0
        %831 = vmatprep.subr.mxu0 0.0
        %832 = vmatpush2.msra.mxu0 0.0
        %833 = vmatprep.subr.mxu0 0.0
        %834 = vmatpush2.msra.mxu0 0.0
        %835 = vmatprep.subr.mxu0 0.0
        %836 = vmatpush2.msra.mxu0 0.0
        %837 = vmatprep.subr.mxu0 0.0
        %838 = vmatpush2.msra.mxu0 0.0
        %839 = vmatprep.subr.mxu0 0.0
        %840 = vmatpush2.msra.mxu0 0.0
        %841 = vmatprep.subr.mxu0 0.0
        %842 = vmatpush2.msra.mxu0 0.0
        %843 = vmatprep.subr.mxu0 0.0
        %844 = vmatpush2.msra.mxu0 0.0
        %845 = vmatprep.subr.mxu0 0.0
        %846 = vmatpush2.msra.mxu0 0.0
        %847 = vmatprep.subr.mxu0 0.0
        %848 = vmatpush2.msra.mxu0 0.0
        %849 = vmatprep.subr.mxu0 0.0
        %850 = vmatpush2.msra.mxu0 0.0
        %851 = vmatprep.subr.mxu0 0.0
        %852 = vmatpush2.msra.mxu0 0.0
        %853 = vmatprep.mubr.f32.mxu0 0.0
        %854 = vmatmul.mubr.f32.gmra.mxu0 %v787
        %v855 = vpop.f32.mrf.mxu0
        %v856 = vadd.f32 %v784, %v855
        %v857 = vpop.f32.mrf.mxu0
        %858 = vdwg.mxu0
        %v859 = vpack.c.bf16 %v856, %v856
        %860 = vst.msk [vmem:[%s561] sm:$0xf] %vm649, %v859
        %v862 = vunpack.c.l.b16 %v859
        %v863 = vpack.c.b16 %v862, %v862
        %864 = vrot.lane.b32.xlu0 %v863, 120
        %v865 = vpop.permute.xlu0 %864
        %s867 = scalar_lea.vmem %s561, 4 [#allocation16]
        %868 = vst.msk [vmem:[%s867] sm:$0xf] %vm649, %v865
        %869 = vrot.lane.b32.xlu0 %v863, 112
        %v870 = vpop.permute.xlu0 %869
        %s872 = scalar_lea.vmem %s561, 8 [#allocation16]
        %873 = vst.msk [vmem:[%s872] sm:$0xf] %vm649, %v870
        %874 = vrot.lane.b32.xlu0 %v863, 104
        %v875 = vpop.permute.xlu0 %874
        %s877 = scalar_lea.vmem %s561, 12 [#allocation16]
        %878 = vst.msk [vmem:[%s877] sm:$0xf] %vm649, %v875
        %s879 = sand.u32 %s269, 1
        %s880 = scalar_lea.sflag [#allocation4], %s879
        %s881 = sand.u32 %s269, 1
        %s882 = smul.addr %s881, 16
        %s883 = scalar_lea.vmem [#allocation13], %s882
        %s884 = sand.u32 %s37, 1
        %s885 = scalar_lea.sflag [#allocation15], %s884
        %s886 = sand.u32 %s297, 1
        %s887 = smul.addr %s886, 16
        %s888 = scalar_lea.vmem [#allocation14], %s887
        %s889 = sand.u32 %s37, 1
        %s890 = scalar_lea.sflag [#allocation15], %s889
        %s891 = sand.u32 %s325, 1
        %s892 = smul.addr %s891, 16
        %s893 = scalar_lea.vmem [#allocation16], %s892
        // Predicated region
        $region81: #{tpu_custom_call.1} parent=55 // pred_check
          %p894 = pneg %p279
        $region82: #{tpu_custom_call.1} parent=55 // pred_check_branch
          %896 = sbr.rel (%p894) target = $region84
        $region83: #{tpu_custom_call.1} parent=55 // pred_region
          %s898 = ssub.s32 256, 256
          %899 = vsyncadd %s880, %s898
          %s900 = smul.addr %s41, 4
          %s901 = sadd.s32 %s42, %s900
          %s902 = smul.addr %s901, 64
          %s903 = scalar_lea.hbm %s9, %s902
          %s904 = sshll.u32 %s883, 4
          %s905 = int_to_ptr.vmem [resolvable:$true] %s904
          %910 = dma.vmem_to_hbm [thread:$0]  %s905, 256, %s903, %s880, 64, 64, 4
        $region84: #{tpu_custom_call.1} parent=55 // pred_fallthru
          _
        // Predicated region
        $region85: #{tpu_custom_call.1} parent=55 // pred_check
          %p911 = pneg %p307
        $region86: #{tpu_custom_call.1} parent=55 // pred_check_branch
          %913 = sbr.rel (%p911) target = $region88
        $region87: #{tpu_custom_call.1} parent=55 // pred_region
          %s915 = ssub.s32 256, 256
          %916 = vsyncadd %s885, %s915
          %s917 = smul.addr %s41, 4
          %s918 = sadd.s32 %s42, %s917
          %s919 = smul.addr %s918, 64
          %s920 = scalar_lea.hbm %s10, %s919
          %s921 = sshll.u32 %s888, 4
          %s922 = int_to_ptr.vmem [resolvable:$true] %s921
          %927 = dma.vmem_to_hbm [thread:$0]  %s922, 256, %s920, %s885, 64, 64, 4
        $region88: #{tpu_custom_call.1} parent=55 // pred_fallthru
          _
        // Predicated region
        $region89: #{tpu_custom_call.1} parent=55 // pred_check
          %p928 = pneg %p335
        $region90: #{tpu_custom_call.1} parent=55 // pred_check_branch
          %930 = sbr.rel (%p928) target = $region92
        $region91: #{tpu_custom_call.1} parent=55 // pred_region
          %s932 = ssub.s32 256, 256
          %933 = vsyncadd %s890, %s932
          %s934 = smul.addr %s41, 4
          %s935 = sadd.s32 %s42, %s934
          %s936 = smul.addr %s935, 64
          %s937 = scalar_lea.hbm %s11, %s936
          %s938 = sshll.u32 %s893, 4
          %s939 = int_to_ptr.vmem [resolvable:$true] %s938
          %944 = dma.vmem_to_hbm [thread:$0]  %s939, 256, %s937, %s890, 64, 64, 4
        $region92: #{tpu_custom_call.1} parent=55 // pred_fallthru
          _
      $region56: #{tpu_custom_call.1} parent=5 // pred_fallthru
        _
      %p945 = scmp.le.s32.totalorder 2, %s32
      // Predicated region
      $region93: #{tpu_custom_call.1} parent=5 // pred_check
        %p946 = pneg %p945
      $region94: #{tpu_custom_call.1} parent=5 // pred_check_branch
        %948 = sbr.rel (%p946) target = $region96
      $region95: #{tpu_custom_call.1} parent=5 // pred_region
        %s949 = ssub.s32 %s32, 2
        // Predicated region
        $region97: #{tpu_custom_call.1} parent=95 // pred_check
          %p950 = pneg %p285
        $region98: #{tpu_custom_call.1} parent=95 // pred_check_branch
          %952 = sbr.rel (%p950) target = $region100
        $region99: #{tpu_custom_call.1} parent=95 // pred_region
          %s953 = sand.u32 %s270, 1
          %s954 = scalar_lea.sflag [#allocation4], %s953
          %s955 = sand.u32 %s270, 1
          %s956 = smul.addr %s955, 16
          %s957 = scalar_lea.vmem [#allocation13], %s956
          %958 = dma.done %s954, 256
        $region100: #{tpu_custom_call.1} parent=95 // pred_fallthru
          _
        // Predicated region
        $region101: #{tpu_custom_call.1} parent=95 // pred_check
          %p959 = pneg %p313
        $region102: #{tpu_custom_call.1} parent=95 // pred_check_branch
          %961 = sbr.rel (%p959) target = $region104
        $region103: #{tpu_custom_call.1} parent=95 // pred_region
          %s962 = sand.u32 %s38, 1
          %s963 = scalar_lea.sflag [#allocation15], %s962
          %s964 = sand.u32 %s298, 1
          %s965 = smul.addr %s964, 16
          %s966 = scalar_lea.vmem [#allocation14], %s965
          %967 = dma.done %s963, 256
        $region104: #{tpu_custom_call.1} parent=95 // pred_fallthru
          _
        // Predicated region
        $region105: #{tpu_custom_call.1} parent=95 // pred_check
          %p968 = pneg %p341
        $region106: #{tpu_custom_call.1} parent=95 // pred_check_branch
          %970 = sbr.rel (%p968) target = $region108
        $region107: #{tpu_custom_call.1} parent=95 // pred_region
          %s971 = sand.u32 %s38, 1
          %s972 = scalar_lea.sflag [#allocation15], %s971
          %s973 = sand.u32 %s326, 1
          %s974 = smul.addr %s973, 16
          %s975 = scalar_lea.vmem [#allocation16], %s974
          %976 = dma.done %s972, 256
        $region108: #{tpu_custom_call.1} parent=95 // pred_fallthru
          _
      $region96: #{tpu_custom_call.1} parent=5 // pred_fallthru
        _
    $region6: #{tpu_custom_call.1} parent=1 // loop_footer
      %s36 = sadd.s32 1, %s32
    $region7: #{tpu_custom_call.1} parent=1 // loop_footer_branch
      %31 = sbr.rel target = $region3
    $region8: #{tpu_custom_call.1} parent=1 // loop_exit
      _
    %977 = vsyncpa [#allocation3], 1
    %s978 = scalar_lea.sflag [#allocation3], 1
    %979 = vsyncpa %s978, 1
    %980 = vsyncpa [#allocation6], 1
    %s981 = scalar_lea.sflag [#allocation6], 1
    %982 = vsyncpa %s981, 1
    %983 = vsyncpa [#allocation9], 1
    %984 = vsyncpa [#allocation12], 1
    %985 = vsyncpa [#allocation4], 1
    %s986 = scalar_lea.sflag [#allocation4], 1
    %987 = vsyncpa %s986, 1
    %988 = vsyncpa [#allocation15], 1
    %s989 = scalar_lea.sflag [#allocation15], 1
    %990 = vsyncpa %s989, 1

</llo_original>
